<compile_context>
chip_gen: v7x
topology: tpu7x:2x2x1
jax: 0.10.0
libtpu: 0.0.40
codegen_flags: <defaults>
</compile_context>

<pallas_src>
import jax
import jax.numpy as jnp
from jax.experimental import pallas as pl
from jax.experimental.pallas import tpu as pltpu


def _patch_embed_kernel(tok_ref, w_ref, add_ref, out_ref):
    # tok_ref: [tm, K]  token rows (zero row per batch for the cls slot + row padding)
    # w_ref:   [K, D]   flattened conv weight (resident across grid steps)
    # add_ref: [tm, D]  f32 additive matrix = bias + pos_embed (+ cls row), resident
    # out_ref: [tm, D]
    y = jnp.dot(tok_ref[...], w_ref[...], preferred_element_type=jnp.float32)  # MXU
    out_ref[...] = (y + add_ref[...]).astype(out_ref.dtype)


def _choose_batches_per_tile(B, Tp, target_rows=512):
    """Largest divisor k of B with k*Tp <= target_rows; prefer >=2 grid tiles (megacore)."""
    best = 1
    for k in range(1, B + 1):
        if B % k == 0 and k * Tp <= target_rows:
            best = k
    if B // best < 2:  # prefer an even/>=2 parallel grid so both v7x TensorCores get work
        for k in range(best, 0, -1):
            if B % k == 0 and B // k >= 2 and k * Tp <= target_rows:
                best = k
                break
    return best


def patch_embeds_forward(x, conv_w, conv_b, cls_token, pos_embed, patch_size):
    """Forward pass of PatchEmbeds.

    x:         [B, C, H, W]            (NCHW, like PyTorch)
    conv_w:    [D, C, ph, pw]          (PyTorch Conv2d weight layout)
    conv_b:    [D]
    cls_token: [1, 1, D]
    pos_embed: [1, num_patches + 1, D]
    returns:   [B, num_patches + 1, D]
    """
    B, C, H, W = x.shape
    D = conv_w.shape[0]
    ph = pw = patch_size
    gh, gw = H // ph, W // pw
    P = gh * gw                          # num_patches
    K = C * ph * pw
    T = P + 1                            # tokens incl. cls
    Tp = ((T + 7) // 8) * 8              # row-pad tokens to a sublane (8) multiple

    # --- glue: extract non-overlapping patches, flatten in (C, kh, kw) order to match conv ---
    # TODO(synk): fuse patch extraction into the kernel (gh grid axis + manual row-strip DMA)
    # to avoid this extra HBM pass of the input on large images.
    patches = x.reshape(B, C, gh, ph, gw, pw)
    patches = jnp.transpose(patches, (0, 2, 4, 1, 3, 5)).reshape(B, P, K)     # [B, P, K]

    # Prepend a zero "cls" row and zero-pad to Tp rows per batch: these rows contribute 0 to
    # the matmul, so cls/pos handling collapses into the additive matrix (no output concat).
    tokens = jnp.pad(patches, ((0, 0), (1, Tp - T), (0, 0)))                  # [B, Tp, K]

    w_flat = conv_w.reshape(D, K).T.astype(x.dtype)                           # [K, D]

    # Additive matrix in f32: row 0 = cls + pos[0]; rows 1..P = pos[1:] + conv_b; pad rows = 0.
    add = jnp.concatenate(
        [
            cls_token[0].astype(jnp.float32) + pos_embed[0, 0:1].astype(jnp.float32),
            pos_embed[0, 1:].astype(jnp.float32) + conv_b.astype(jnp.float32)[None, :],
        ],
        axis=0,
    )                                                                         # [T, D]
    add = jnp.pad(add, ((0, Tp - T), (0, 0)))                                 # [Tp, D]

    # --- fold batch into M: M = B*Tp rows, tm = k*Tp rows (k whole batches) per grid step ---
    k = _choose_batches_per_tile(B, Tp)
    tm = k * Tp
    M = B * Tp
    tokens_flat = tokens.reshape(M, K)                                        # [M, K]
    add_tile = jnp.tile(add, (k, 1))                                          # [tm, D], resident

    out_flat = pl.pallas_call(
        _patch_embed_kernel,
        out_shape=jax.ShapeDtypeStruct((M, D), x.dtype),
        grid_spec=pltpu.PrefetchScalarGridSpec(
            num_scalar_prefetch=0,
            grid=(M // tm,),
            in_specs=[
                pl.BlockSpec((tm, K), lambda i: (i, 0)),   # streamed token rows
                pl.BlockSpec((K, D), lambda i: (0, 0)),    # weight, stays resident
                pl.BlockSpec((tm, D), lambda i: (0, 0)),   # add matrix, stays resident
            ],
            out_specs=pl.BlockSpec((tm, D), lambda i: (i, 0)),
        ),
        compiler_params=pltpu.CompilerParams(
            dimension_semantics=("parallel",)),
    )(tokens_flat, w_flat, add_tile)

    out = out_flat.reshape(B, Tp, D)
    if Tp != T:
        out = out[:, :T, :]              # strip row padding (no-op when Tp == T)
    # pos_drop has p=0.0 -> identity.
    return out


def _reference(x, conv_w, conv_b, cls_token, pos_embed, patch_size):
    """Pure-JAX reference (conv via lax.conv_general_dilated) for correctness check."""
    B = x.shape[0]
    D = conv_w.shape[0]
    y = jax.lax.conv_general_dilated(
        x, conv_w,
        window_strides=(patch_size, patch_size),
        padding="VALID",
        dimension_numbers=("NCHW", "OIHW", "NCHW"),
    ) + conv_b[None, :, None, None]                              # [B, D, gh, gw]
    y = y.reshape(B, D, -1).transpose(0, 2, 1)                   # [B, P, D]
    cls = jnp.broadcast_to(cls_token, (B, 1, D))
    y = jnp.concatenate([cls, y], axis=1)
    y = y + pos_embed[:, : y.shape[1], :]
    return y


if __name__ == "__main__":
    # Small shapes consistent with the module: img=16, patch=4, in_chans=4, embed_dim=32.
    B, C, H, W = 2, 4, 16, 16
    patch_size = 4
    D = 32
    P = (H // patch_size) * (W // patch_size)                    # 16 patches

    key = jax.random.PRNGKey(0)
    k_x, k_w, k_b, k_cls, k_pos = jax.random.split(key, 5)

    x = jax.random.normal(k_x, (B, C, H, W), dtype=jnp.float32)
    conv_w = 0.02 * jax.random.normal(k_w, (D, C, patch_size, patch_size), dtype=jnp.float32)
    conv_b = 0.02 * jax.random.normal(k_b, (D,), dtype=jnp.float32)
    # (PyTorch inits cls_token / pos_embed to zeros; use small random values so the adds are exercised.)
    cls_token = 0.02 * jax.random.normal(k_cls, (1, 1, D), dtype=jnp.float32)
    pos_embed = 0.02 * jax.random.normal(k_pos, (1, P + 1, D), dtype=jnp.float32)

    out = patch_embeds_forward(x, conv_w, conv_b, cls_token, pos_embed, patch_size)
    out = jax.block_until_ready(out)

    ref = _reference(x, conv_w, conv_b, cls_token, pos_embed, patch_size)
    assert out.shape == (B, P + 1, D), out.shape
    assert jnp.allclose(out, ref, atol=1e-5, rtol=1e-5), float(jnp.max(jnp.abs(out - ref)))

    print("KERNEL_OK")
</pallas_src>

<mosaic_0001>
module attributes {stable_mosaic.version = 11 : i64} {
  func.func @_patch_embed_kernel(%arg0: i32, %arg1: memref<24x64xf32, #tpu.memory_space<vmem>>, %arg2: memref<64x32xf32, #tpu.memory_space<vmem>>, %arg3: memref<24x32xf32, #tpu.memory_space<vmem>>, %arg4: memref<24x32xf32, #tpu.memory_space<vmem>>) attributes {dimension_semantics = [#tpu.dimension_semantics<parallel>], iteration_bounds = array<i64: 2>, scalar_prefetch = 0 : i64, scratch_operands = 0 : i64, tpu.core_type = #tpu.core_type<tc>, window_params = [{transform_indices = @transform_0, window_bounds = array<i64: 24, 64>}, {pipeline_mode = #tpu.pipeline_mode<synchronous>, transform_indices = @transform_1, window_bounds = array<i64: 64, 32>}, {pipeline_mode = #tpu.pipeline_mode<synchronous>, transform_indices = @transform_2, window_bounds = array<i64: 24, 32>}, {transform_indices = @transform_3, window_bounds = array<i64: 24, 32>}]} {
    %c0 = arith.constant 0 : index
    %c0_0 = arith.constant 0 : index
    %0 = vector.load %arg1[%c0, %c0_0] : memref<24x64xf32, #tpu.memory_space<vmem>>, vector<24x64xf32>
    %c0_1 = arith.constant 0 : index
    %c0_2 = arith.constant 0 : index
    %1 = vector.load %arg2[%c0_1, %c0_2] : memref<64x32xf32, #tpu.memory_space<vmem>>, vector<64x32xf32>
    %cst = arith.constant dense<0.000000e+00> : vector<24x32xf32>
    %2 = tpu.matmul %0, %1, %cst {dimension_numbers = #tpu.dot_dimension_numbers<[1], [0], [0], [1], [0, 0, 1, 1], [], []>} : vector<24x64xf32>, vector<64x32xf32>, vector<24x32xf32> -> vector<24x32xf32>
    %c0_3 = arith.constant 0 : index
    %c0_4 = arith.constant 0 : index
    %3 = vector.load %arg3[%c0_3, %c0_4] : memref<24x32xf32, #tpu.memory_space<vmem>>, vector<24x32xf32>
    %4 = arith.addf %2, %3 : vector<24x32xf32>
    %c0_5 = arith.constant 0 : index
    %c0_6 = arith.constant 0 : index
    %5 = vector.load %arg4[%c0_5, %c0_6] : memref<24x32xf32, #tpu.memory_space<vmem>>, vector<24x32xf32>
    tpu.vector_store %arg4[%c0_5, %c0_6], %4 {strides = array<i32>} : memref<24x32xf32, #tpu.memory_space<vmem>>, vector<24x32xf32>,
    return
  }
  func.func @transform_0(%arg0: i32) -> (i32, i32) {
    %c0_i32 = arith.constant 0 : i32
    %c0_i32_0 = arith.constant 0 : i32
    return %arg0, %c0_i32 : i32, i32
  }
  func.func @transform_1(%arg0: i32) -> (i32, i32) {
    %c0_i32 = arith.constant 0 : i32
    %c0_i32_0 = arith.constant 0 : i32
    %c0_i32_1 = arith.constant 0 : i32
    return %c0_i32, %c0_i32_0 : i32, i32
  }
  func.func @transform_2(%arg0: i32) -> (i32, i32) {
    %c0_i32 = arith.constant 0 : i32
    %c0_i32_0 = arith.constant 0 : i32
    %c0_i32_1 = arith.constant 0 : i32
    return %c0_i32, %c0_i32_0 : i32, i32
  }
  func.func @transform_3(%arg0: i32) -> (i32, i32) {
    %c0_i32 = arith.constant 0 : i32
    %c0_i32_0 = arith.constant 0 : i32
    return %arg0, %c0_i32 : i32, i32
  }
}

</mosaic_0001>

<llo_original>
// kernel: tpu_custom_call.1
$region0: #{tpu_custom_call.1}
  #allocation0 [shape = 'u32[]', space=smem, size = 0x4, offset = 0x4, fixed_abs, tag = 'smem constant byte address 0x4 - core index']
  #allocation1 [shape = 'u32[144,128]{1,0:T(1,128)}', space=vmem, size = 0x12000, scoped, tag = 'internal scratch']
  %s0 = inlined_call_operand.vmem [shape: f32[48,64], index: 0, kind: input, shape index: {}]
  %s1 = inlined_call_operand.vmem [shape: f32[64,32], index: 1, kind: input, shape index: {}]
  %s2 = inlined_call_operand.vmem [shape: f32[24,32], index: 2, kind: input, shape index: {}]
  %s3 = inlined_call_operand.vmem [shape: f32[48,32], index: 3, kind: output, shape index: {}]
  %s4 = sld [smem:[#allocation0]]
  $region45: #{tpu_custom_call.1} parent=0
    _
  %s6 = ssub.s32 1, %s4
  %s7 = scalar_select 0, %s6, %s4
  loop: start=0, step=1, limit=4
  $region2: #{tpu_custom_call.1} parent=0 // loop_pre_header
    _
  $region3: #{tpu_custom_call.1} parent=0 // loop_header
    %s9 = sphi 0, %s13
    %p10 = scmp.ge.s32.totalorder %s9, 4
    %s19 = sphi 0, %s21
    %s22 = sphi 0, %s19
    %s23 = sphi 0, %s22
    %s39 = sphi 0, %s23
    %s43 = sphi 0, %s43
    %s45 = sphi 0, %s43
    %s46 = sphi 0, %s45
    %s60 = sphi 0, %s46
    %s64 = sphi 0, %s64
    %s66 = sphi 0, %s64
    %s67 = sphi 0, %s66
    %s81 = sphi 0, %s67
    %s87 = sphi 0, %s89
    %s90 = sphi 0, %s87
    %s91 = sphi 0, %s90
    %s107 = sphi 0, %s91
  $region4: #{tpu_custom_call.1} parent=0 // loop_header_branch
    %12 = sbr.rel (%p10) target = $region8
  $region5: #{tpu_custom_call.1} parent=0 // loop_body
    %s14 = ssub.s32 %s9, 1
    %s15 = ssub.s32 %s9, 2
    %s16 = sadd.s32 %s9, 1
    %s17 = ssub.s32 %s9, %s16
    %p18 = scmp.eq.s32.totalorder %s17, 0
    %s20 = sadd.s32 %s19, 1
    %s21 = scalar_select %p18, %s19, %s20
    %p24 = pneg %p18
    %p25 = scmp.eq.s32.totalorder %s9, 1
    %p26 = por %p24, %p25
    %p27 = scmp.ne.s32.totalorder %s19, %s22
    %p28 = scmp.eq.s32.totalorder %s9, 0
    %p29 = por %p27, %p28
    %p30 = scmp.ne.s32.totalorder %s19, %s22
    %p31 = scmp.eq.s32.totalorder %s14, 1
    %p32 = por %p30, %p31
    %p33 = scmp.ne.s32.totalorder %s22, %s23
    %p34 = scmp.eq.s32.totalorder %s14, 0
    %p35 = por %p33, %p34
    %p36 = scmp.ne.s32.totalorder %s22, %s23
    %p37 = scmp.eq.s32.totalorder %s15, 1
    %p38 = por %p36, %p37
    %p40 = scmp.ne.s32.totalorder %s23, %s39
    %p41 = scmp.eq.s32.totalorder %s15, 0
    %p42 = por %p40, %p41
    %s44 = sadd.s32 %s43, 1
    %p47 = scmp.eq.s32.totalorder %s9, 1
    %p48 = scmp.ne.s32.totalorder %s43, %s45
    %p49 = scmp.eq.s32.totalorder %s9, 0
    %p50 = por %p48, %p49
    %p51 = scmp.ne.s32.totalorder %s43, %s45
    %p52 = scmp.eq.s32.totalorder %s14, 1
    %p53 = por %p51, %p52
    %p54 = scmp.ne.s32.totalorder %s45, %s46
    %p55 = scmp.eq.s32.totalorder %s14, 0
    %p56 = por %p54, %p55
    %p57 = scmp.ne.s32.totalorder %s45, %s46
    %p58 = scmp.eq.s32.totalorder %s15, 1
    %p59 = por %p57, %p58
    %p61 = scmp.ne.s32.totalorder %s46, %s60
    %p62 = scmp.eq.s32.totalorder %s15, 0
    %p63 = por %p61, %p62
    %s65 = sadd.s32 %s64, 1
    %p68 = scmp.eq.s32.totalorder %s9, 1
    %p69 = scmp.ne.s32.totalorder %s64, %s66
    %p70 = scmp.eq.s32.totalorder %s9, 0
    %p71 = por %p69, %p70
    %p72 = scmp.ne.s32.totalorder %s64, %s66
    %p73 = scmp.eq.s32.totalorder %s14, 1
    %p74 = por %p72, %p73
    %p75 = scmp.ne.s32.totalorder %s66, %s67
    %p76 = scmp.eq.s32.totalorder %s14, 0
    %p77 = por %p75, %p76
    %p78 = scmp.ne.s32.totalorder %s66, %s67
    %p79 = scmp.eq.s32.totalorder %s15, 1
    %p80 = por %p78, %p79
    %p82 = scmp.ne.s32.totalorder %s67, %s81
    %p83 = scmp.eq.s32.totalorder %s15, 0
    %p84 = por %p82, %p83
    %s85 = ssub.s32 %s9, %s16
    %p86 = scmp.eq.s32.totalorder %s85, 0
    %s88 = sadd.s32 %s87, 1
    %s89 = scalar_select %p86, %s87, %s88
    %p92 = pneg %p86
    %p93 = scmp.eq.s32.totalorder %s9, 1
    %p94 = por %p92, %p93
    %p95 = scmp.ne.s32.totalorder %s87, %s90
    %p96 = scmp.eq.s32.totalorder %s9, 0
    %p97 = por %p95, %p96
    %p98 = scmp.ne.s32.totalorder %s87, %s90
    %p99 = scmp.eq.s32.totalorder %s14, 1
    %p100 = por %p98, %p99
    %p101 = scmp.ne.s32.totalorder %s90, %s91
    %p102 = scmp.eq.s32.totalorder %s14, 0
    %p103 = por %p101, %p102
    %p104 = scmp.ne.s32.totalorder %s90, %s91
    %p105 = scmp.eq.s32.totalorder %s15, 1
    %p106 = por %p104, %p105
    %p108 = scmp.ne.s32.totalorder %s91, %s107
    %p109 = scmp.eq.s32.totalorder %s15, 0
    %p110 = por %p108, %p109
    %p111 = scmp.le.s32.totalorder 1, %s9
    %p112 = scmp.lt.s32.totalorder %s9, 3
    %p113 = pnand %p111, %p112
    %p114 = pneg %p113
    // Predicated region
    $region9: #{tpu_custom_call.1} parent=5 // pred_check
      _
    $region10: #{tpu_custom_call.1} parent=5 // pred_check_branch
      %116 = sbr.rel (%p113) target = $region12
    $region11: #{tpu_custom_call.1} parent=5 // pred_region
      %s117 = ssub.s32 %s9, 1
      // Predicated region
      $region13: #{tpu_custom_call.1} parent=11 // pred_check
        %p118 = pneg %p56
      $region14: #{tpu_custom_call.1} parent=11 // pred_check_branch
        %120 = sbr.rel (%p118) target = $region16
      $region15: #{tpu_custom_call.1} parent=11 // pred_region
        _
      $region16: #{tpu_custom_call.1} parent=11 // pred_fallthru
        _
      // Predicated region
      $region17: #{tpu_custom_call.1} parent=11 // pred_check
        %p121 = pneg %p77
      $region18: #{tpu_custom_call.1} parent=11 // pred_check_branch
        %123 = sbr.rel (%p121) target = $region20
      $region19: #{tpu_custom_call.1} parent=11 // pred_region
        _
      $region20: #{tpu_custom_call.1} parent=11 // pred_fallthru
        _
    $region12: #{tpu_custom_call.1} parent=5 // pred_fallthru
      _
    %p124 = scmp.lt.s32.totalorder %s9, 2
    // Predicated region
    $region21: #{tpu_custom_call.1} parent=5 // pred_check
      %p125 = pneg %p124
    $region22: #{tpu_custom_call.1} parent=5 // pred_check_branch
      %127 = sbr.rel (%p125) target = $region24
    $region23: #{tpu_custom_call.1} parent=5 // pred_region
      // Predicated region
      $region25: #{tpu_custom_call.1} parent=23 // pred_check
        %p128 = pneg %p29
      $region26: #{tpu_custom_call.1} parent=23 // pred_check_branch
        %130 = sbr.rel (%p128) target = $region28
      $region27: #{tpu_custom_call.1} parent=23 // pred_region
        %s131 = smul.u32 3, %s9
        %p132 = scmp.lt.s32.totalorder %s131, 5
        %s133 = scalar_select %p132, %s131, 5
        %s134 = smul.addr %s133, 8
        %s135 = scalar_lea.vmem %s0, %s134
        %s136 = smul.u32 3, %s9
      $region28: #{tpu_custom_call.1} parent=23 // pred_fallthru
        _
    $region24: #{tpu_custom_call.1} parent=5 // pred_fallthru
      _
    %p137 = scmp.le.s32.totalorder 1, %s9
    %p138 = scmp.lt.s32.totalorder %s9, 3
    %p139 = pnand %p137, %p138
    %p140 = pneg %p139
    // Predicated region
    $region29: #{tpu_custom_call.1} parent=5 // pred_check
      _
    $region30: #{tpu_custom_call.1} parent=5 // pred_check_branch
      %142 = sbr.rel (%p139) target = $region32
    $region31: #{tpu_custom_call.1} parent=5 // pred_region
      %s143 = ssub.s32 %s9, 1
      %s144 = smul.u32 3, %s14
      %p145 = scmp.lt.s32.totalorder %s144, 5
      %s146 = scalar_select %p145, %s144, 5
      %s147 = smul.addr %s146, 8
      %s148 = scalar_lea.vmem %s0, %s147
      %p149 = pneg %p35
      %p150 = pneg %p32
      %p151 = pneg %p56
      %p152 = pneg %p53
      %p153 = pneg %p77
      %p154 = pneg %p74
      %p155 = pneg %p103
      %p156 = pneg %p100
      %s157 = smul.u32 3, %s14
      %p158 = scmp.lt.s32.totalorder %s157, 5
      %s159 = scalar_select %p158, %s157, 5
      %s160 = smul.addr %s159, 8
      %s161 = scalar_lea.vmem %s3, %s160
      %s162 = smul.u32 3, %s14
      %p163 = scmp.lt.s32.totalorder %s162, 5
      %s164 = scalar_select %p163, %s162, 5
      %s165 = smul.addr %s164, 8
      %s166 = scalar_lea.vmem %s0, %s165
      %s167 = smul.u32 3, %s14
      %s168 = smul.u32 3, %s14
      %p169 = scmp.lt.s32.totalorder %s168, 5
      %s170 = scalar_select %p169, %s168, 5
      %s171 = smul.addr %s170, 8
      %s172 = scalar_lea.vmem %s3, %s171
      %s173 = smul.u32 3, %s14
      %v174 = vld [vmem:[%s166] sm:$0xff]
      %v175 = vld [vmem:[%s166 + $0x8] sm:$0xff]
      %v176 = vld [vmem:[%s166 + $0x10] sm:$0xff]
      %v177 = vld [vmem:[%s1] sm:$0xff]
      %v178 = vld [vmem:[%s1 + $0x8] sm:$0xff]
      %v179 = vld [vmem:[%s1 + $0x10] sm:$0xff]
      %v180 = vld [vmem:[%s1 + $0x18] sm:$0xff]
      %v181 = vld [vmem:[%s1 + $0x20] sm:$0xff]
      %v182 = vld [vmem:[%s1 + $0x28] sm:$0xff]
      %v183 = vld [vmem:[%s1 + $0x30] sm:$0xff]
      %v184 = vld [vmem:[%s1 + $0x38] sm:$0xff]
      %v185 = vld [vmem:[%s2] sm:$0xff]
      %v186 = vld [vmem:[%s2 + $0x8] sm:$0xff]
      %v187 = vld [vmem:[%s2 + $0x10] sm:$0xff]
      %vm188 = vcmask 523264
      %v190 = vsel %vm188, %v174, 0
      %v193 = vsel %vm188, %v175, 0
      %v196 = vsel %vm188, %v176, 0
      %198 = vmatprep.subr.mxu0 0.0
      %199 = vmatpush1.msra.mxu0 %v177
      %200 = vmatprep.subr.mxu0 0.0
      %201 = vmatpush1.msra.mxu0 %v178
      %202 = vmatprep.subr.mxu0 0.0
      %203 = vmatpush1.msra.mxu0 %v179
      %204 = vmatprep.subr.mxu0 0.0
      %205 = vmatpush1.msra.mxu0 %v180
      %206 = vmatprep.subr.mxu0 0.0
      %207 = vmatpush1.msra.mxu0 %v181
      %208 = vmatprep.subr.mxu0 0.0
      %209 = vmatpush1.msra.mxu0 %v182
      %210 = vmatprep.subr.mxu0 0.0
      %211 = vmatpush1.msra.mxu0 %v183
      %212 = vmatprep.subr.mxu0 0.0
      %213 = vmatpush1.msra.mxu0 %v184
      %214 = vmatprep.subr.mxu0 0.0
      %215 = vmatpush1.msra.mxu0 0.0
      %216 = vmatprep.subr.mxu0 0.0
      %217 = vmatpush1.msra.mxu0 0.0
      %218 = vmatprep.subr.mxu0 0.0
      %219 = vmatpush1.msra.mxu0 0.0
      %220 = vmatprep.subr.mxu0 0.0
      %221 = vmatpush1.msra.mxu0 0.0
      %222 = vmatprep.subr.mxu0 0.0
      %223 = vmatpush1.msra.mxu0 0.0
      %224 = vmatprep.subr.mxu0 0.0
      %225 = vmatpush1.msra.mxu0 0.0
      %226 = vmatprep.subr.mxu0 0.0
      %227 = vmatpush1.msra.mxu0 0.0
      %228 = vmatprep.subr.mxu0 0.0
      %229 = vmatpush1.msra.mxu0 0.0
      %230 = vmatprep.subr.mxu0 0.0
      %231 = vmatpush1.msra.mxu0 0.0
      %232 = vmatprep.subr.mxu0 0.0
      %233 = vmatpush1.msra.mxu0 0.0
      %234 = vmatprep.subr.mxu0 0.0
      %235 = vmatpush1.msra.mxu0 0.0
      %236 = vmatprep.subr.mxu0 0.0
      %237 = vmatpush1.msra.mxu0 0.0
      %238 = vmatprep.subr.mxu0 0.0
      %239 = vmatpush1.msra.mxu0 0.0
      %240 = vmatprep.subr.mxu0 0.0
      %241 = vmatpush1.msra.mxu0 0.0
      %242 = vmatprep.subr.mxu0 0.0
      %243 = vmatpush1.msra.mxu0 0.0
      %244 = vmatprep.subr.mxu0 0.0
      %245 = vmatpush1.msra.mxu0 0.0
      %246 = vmatprep.subr.mxu0 0.0
      %247 = vmatpush1.msra.mxu0 0.0
      %248 = vmatprep.subr.mxu0 0.0
      %249 = vmatpush1.msra.mxu0 0.0
      %250 = vmatprep.subr.mxu0 0.0
      %251 = vmatpush1.msra.mxu0 0.0
      %252 = vmatprep.subr.mxu0 0.0
      %253 = vmatpush1.msra.mxu0 0.0
      %254 = vmatprep.subr.mxu0 0.0
      %255 = vmatpush1.msra.mxu0 0.0
      %256 = vmatprep.subr.mxu0 0.0
      %257 = vmatpush1.msra.mxu0 0.0
      %258 = vmatprep.subr.mxu0 0.0
      %259 = vmatpush1.msra.mxu0 0.0
      %260 = vmatprep.subr.mxu0 0.0
      %261 = vmatpush1.msra.mxu0 0.0
      %262 = vmatprep.mubr.f32.mxu0 0.0
      %263 = vmatmul.mubr.f32.gmra.mrb[0].mxu0 %v190
      %v264 = vpop.f32.mrb[0].mxu0
      %v265 = vadd.f32 %v185, %v264
      %v266 = vpop.f32.mrb[0].mxu0
      %267 = vmatprep.mubr.f32.mxu0 0.0
      %268 = vmatmul.mubr.f32.gmra.mrb[0].mxu0 %v193
      %v269 = vpop.f32.mrb[0].mxu0
      %v270 = vadd.f32 %v186, %v269
      %v271 = vpop.f32.mrb[0].mxu0
      %272 = vmatprep.mubr.f32.mxu0 0.0
      %273 = vmatmul.mubr.f32.gmra.mrb[0].mxu0 %v196
      %v274 = vpop.f32.mrb[0].mxu0
      %v275 = vadd.f32 %v187, %v274
      %v276 = vpop.f32.mrb[0].mxu0
      %277 = vdwg.mxu0
      %vm278 = vcmask 261120
      %279 = vst.msk [vmem:[%s172] sm:$0xff] %vm278, %v265
      %280 = vst.msk [vmem:[%s172 + $0x8] sm:$0xff] %vm278, %v270
      %281 = vst.msk [vmem:[%s172 + $0x10] sm:$0xff] %vm278, %v275
      %s282 = smul.u32 3, %s14
      %p283 = scmp.lt.s32.totalorder %s282, 5
      %s284 = scalar_select %p283, %s282, 5
      %s285 = smul.addr %s284, 8
      %s286 = scalar_lea.vmem %s3, %s285
      // Predicated region
      $region33: #{tpu_custom_call.1} parent=31 // pred_check
        %p287 = pneg %p100
      $region34: #{tpu_custom_call.1} parent=31 // pred_check_branch
        %289 = sbr.rel (%p287) target = $region36
      $region35: #{tpu_custom_call.1} parent=31 // pred_region
        %s290 = smul.u32 3, %s14
      $region36: #{tpu_custom_call.1} parent=31 // pred_fallthru
        _
    $region32: #{tpu_custom_call.1} parent=5 // pred_fallthru
      _
    %p291 = scmp.le.s32.totalorder 2, %s9
    // Predicated region
    $region37: #{tpu_custom_call.1} parent=5 // pred_check
      %p292 = pneg %p291
    $region38: #{tpu_custom_call.1} parent=5 // pred_check_branch
      %294 = sbr.rel (%p292) target = $region40
    $region39: #{tpu_custom_call.1} parent=5 // pred_region
      %s295 = ssub.s32 %s9, 2
      // Predicated region
      $region41: #{tpu_custom_call.1} parent=39 // pred_check
        %p296 = pneg %p106
      $region42: #{tpu_custom_call.1} parent=39 // pred_check_branch
        %298 = sbr.rel (%p296) target = $region44
      $region43: #{tpu_custom_call.1} parent=39 // pred_region
        %s299 = smul.u32 3, %s15
        %p300 = scmp.lt.s32.totalorder %s299, 5
        %s301 = scalar_select %p300, %s299, 5
        %s302 = smul.addr %s301, 8
        %s303 = scalar_lea.vmem %s3, %s302
      $region44: #{tpu_custom_call.1} parent=39 // pred_fallthru
        _
    $region40: #{tpu_custom_call.1} parent=5 // pred_fallthru
      _
  $region6: #{tpu_custom_call.1} parent=0 // loop_footer
    %s13 = sadd.s32 1, %s9
  $region7: #{tpu_custom_call.1} parent=0 // loop_footer_branch
    %8 = sbr.rel target = $region3
  $region8: #{tpu_custom_call.1} parent=0 // loop_exit
    _

</llo_original>
